<compile_context>
chip_gen: v6e
topology: v6e:2x2x1
jax: 0.10.0
libtpu: 0.0.40
codegen_flags: <defaults>
</compile_context>

<pallas_src>
import functools
import math

import jax
import jax.numpy as jnp
from jax.experimental import pallas as pl
from jax.experimental.pallas import tpu as pltpu

_LANE = 128
_SUBLANE = 8


def _round_up(x, m):
    return pl.cdiv(x, m) * m


# ----------------------------------------------------------------------------
# Fused whole-MLP Pallas kernel
# ----------------------------------------------------------------------------
def _fused_mlp_kernel(*refs, activations):
    """refs = (x_ref, w0, b0, w1, b1, ..., wL-1, bL-1, o_ref).

    Weights/biases use constant block indices -> fetched once and resident in
    VMEM across the whole batch grid.  Intermediate activations never touch
    HBM.  Weights are bf16 (MXU-native); accumulation, bias add and the
    relu / leaky_relu epilogue are f32.
    """
    x_ref = refs[0]
    o_ref = refs[-1]
    param_refs = refs[1:-1]

    h = x_ref[...].astype(jnp.float32)                 # (tm, n_in) f32
    for li, act in enumerate(activations):
        w = param_refs[2 * li][...]                    # (p_in_l, p_out_l) bf16
        b = param_refs[2 * li + 1][...]                # (1, p_out_l) f32
        y = jnp.dot(h.astype(jnp.bfloat16), w,
                    preferred_element_type=jnp.float32) + b
        if act == "relu":
            y = jnp.maximum(y, 0.0)
        elif act == "leaky_relu":
            # max(y, 0.01*y) == leaky_relu(y); one fewer VPU op than cmp+select+mul.
            y = jnp.maximum(y, jnp.float32(0.01) * y)
        # act == "none": identity
        h = y
    # Final layer width is padded to 128 lanes; store only the real n_out lanes
    # (in-register slice, no extra kernel / HBM pass).
    o_ref[...] = h[:, : o_ref.shape[1]].astype(o_ref.dtype)


def mlp_forward(params_padded, dims, x, *, tm_max=512):
    """Fused MLP forward: one pallas_call for all layers.

    params_padded: list of (w_bf16, b_f32) with hidden dims padded to 128.
    dims:          list of original (fan_in, fan_out) per layer.
    x:             (M, n_in) f32 (consumed unpadded).
    Returns (M, n_out) f32.
    """
    M, n_in = x.shape
    n_out = dims[-1][1]
    n_layers = len(params_padded)
    activations = ("relu",) + ("leaky_relu",) * (n_layers - 2) + ("none",)

    # ---- Batch tiling: no host-side padding; partial last block is fine. ----
    if M <= _SUBLANE:
        tm = M  # block row dim == full array dim
    else:
        tm = min(tm_max, (M // _SUBLANE) * _SUBLANE)
        # v7x has 2 TensorCores; give the "parallel" batch axis >= 2 grid steps
        # when the batch allows it (no-op on single-TC v5e/v6e, and tiny
        # batches just stay single-step).
        if pl.cdiv(M, tm) < 2:
            tm = max(_SUBLANE, _round_up(pl.cdiv(M, 2), _SUBLANE))
    grid = (pl.cdiv(M, tm),)

    # ---- BlockSpecs: x / out tiled over batch; params whole (constant block
    #      index across the grid -> fetched once, resident in VMEM). ----------
    in_specs = [pl.BlockSpec((tm, n_in), lambda i: (i, 0))]
    flat_params = []
    for (w_p, b_p) in params_padded:
        in_specs.append(pl.BlockSpec(w_p.shape, lambda i: (0, 0)))
        in_specs.append(pl.BlockSpec(b_p.shape, lambda i: (0, 0)))
        flat_params.extend([w_p, b_p])
    out_specs = pl.BlockSpec((tm, n_out), lambda i: (i, 0))

    # ---- Cost estimate + explicit VMEM budget (matters if hidden dims grow). -
    flops = 0
    param_bytes = 0
    for (w_p, b_p) in params_padded:
        flops += 2 * M * w_p.shape[0] * w_p.shape[1]
        param_bytes += w_p.size * w_p.dtype.itemsize + b_p.size * b_p.dtype.itemsize
    bytes_accessed = x.size * x.dtype.itemsize + M * n_out * 4 + param_bytes
    cost = pl.CostEstimate(flops=flops, transcendentals=0,
                           bytes_accessed=bytes_accessed)

    max_width = max(max(w_p.shape[1] for (w_p, _) in params_padded), n_in)
    vmem_est = (2 * tm * n_in * 4          # double-buffered x tile (f32)
                + 2 * tm * n_out * 4       # double-buffered out tile (f32)
                + 2 * param_bytes          # resident (buffered) bf16 params
                + 4 * tm * max_width * 4)  # live f32 activations
    vmem_limit = int(min(32 * 1024 * 1024, max(16 * 1024 * 1024, 4 * vmem_est)))

    return pl.pallas_call(
        functools.partial(_fused_mlp_kernel, activations=activations),
        out_shape=jax.ShapeDtypeStruct((M, n_out), jnp.float32),
        grid_spec=pltpu.PrefetchScalarGridSpec(
            num_scalar_prefetch=0,
            grid=grid,
            in_specs=in_specs,
            out_specs=out_specs,
        ),
        compiler_params=pltpu.CompilerParams(
            dimension_semantics=("parallel",),
            vmem_limit_bytes=vmem_limit,
        ),
        cost_estimate=cost,
    )(x, *flat_params)


# ----------------------------------------------------------------------------
# Parameter construction (mirrors NeuralNetwork.__init__), padded once at init
# ----------------------------------------------------------------------------
def init_params(key, n_in, hidden, n_out):
    """Mirrors the module's layer structure:
    weights ~ U(-0.5, 0.5) (as in the module), biases ~ U(-1/sqrt(fan_in), ...)
    (PyTorch nn.Linear default, left untouched by the module).

    Returns (params, params_padded, dims):
      params        : unpadded f32 (w, b) per layer (pure-JAX reference)
      params_padded : bf16 weights / f32 biases, hidden feature dims
                      zero-padded to 128 ONCE at init (static).  The first
                      layer's in-dim stays n_in (x streams unpadded); the last
                      layer's out-dim is padded and sliced in-kernel.
      dims          : original (fan_in, fan_out) per layer
    """
    dims = [(n_in, hidden[0])]
    # self.hiddens: Linear(hidden[i], hidden[i+1]) for i < len(hidden)-1,
    #               plus Linear(hidden[-1], hidden[-1])
    for h_idx in range(len(hidden) - 1):
        dims.append((hidden[h_idx], hidden[h_idx + 1]))
    dims.append((hidden[-1], hidden[-1]))
    dims.append((hidden[-1], n_out))

    params, params_padded = [], []
    for li, (fan_in, fan_out) in enumerate(dims):
        key, kw, kb = jax.random.split(key, 3)
        w = jax.random.uniform(kw, (fan_in, fan_out), jnp.float32, -0.5, 0.5)
        bound = 1.0 / math.sqrt(fan_in)
        b = jax.random.uniform(kb, (fan_out,), jnp.float32, -bound, bound)
        params.append((w, b))

        p_in = fan_in if li == 0 else _round_up(fan_in, _LANE)
        p_out = _round_up(fan_out, _LANE)
        w_p = jnp.pad(w, ((0, p_in - fan_in), (0, p_out - fan_out)))
        b_p = jnp.pad(b, (0, p_out - fan_out)).reshape(1, p_out)
        params_padded.append((w_p.astype(jnp.bfloat16), b_p.astype(jnp.float32)))

    return params, params_padded, dims


# ----------------------------------------------------------------------------
# References for sanity checking
# ----------------------------------------------------------------------------
def forward_ref(params, x):
    """Pure-JAX f32 reference of the module's forward()."""
    w, b = params[0]
    x = jnp.maximum(x @ w + b, 0.0)
    for (w, b) in params[1:-1]:
        y = x @ w + b
        x = jnp.maximum(y, 0.01 * y)
    w, b = params[-1]
    return x @ w + b


def forward_ref_bf16(params_padded, n_out, x):
    """Reference mirroring the kernel numerics (bf16 weights / bf16 MXU inputs,
    f32 accumulation) — used for a tight correctness check of the kernel."""
    h = x.astype(jnp.float32)
    n_layers = len(params_padded)
    for li, (w_p, b_p) in enumerate(params_padded):
        hq = h.astype(jnp.bfloat16).astype(jnp.float32)
        wq = w_p.astype(jnp.float32)
        y = jnp.dot(hq, wq, precision=jax.lax.Precision.HIGHEST) + b_p
        if li == 0:
            y = jnp.maximum(y, 0.0)
        elif li < n_layers - 1:
            y = jnp.maximum(y, 0.01 * y)
        h = y
    return h[:, :n_out]


if __name__ == "__main__":
    key = jax.random.PRNGKey(0)
    k_x, k_p = jax.random.split(key)

    batch, n_in, hidden, n_out = 8, 32, [32, 64], 4
    x = jax.random.normal(k_x, (batch, n_in), jnp.float32)
    params, params_padded, dims = init_params(k_p, n_in, hidden, n_out)

    out = jax.block_until_ready(mlp_forward(params_padded, dims, x))
    assert out.shape == (batch, n_out)

    # Tight check vs. a reference that mirrors the kernel's bf16 numerics.
    ref_q = forward_ref_bf16(params_padded, n_out, x)
    assert jnp.allclose(out, ref_q, atol=2e-3, rtol=2e-3), \
        float(jnp.max(jnp.abs(out - ref_q)))

    # Loose check vs. the module-precision (f32) forward; the gap is purely the
    # bf16 weight/activation quantization (review: tolerance must be relaxed).
    ref = forward_ref(params, x)
    assert jnp.allclose(out, ref, atol=0.5, rtol=0.1), \
        float(jnp.max(jnp.abs(out - ref)))

    # TODO(synk): NeuralNetwork.update (Adam step / grad clamp) is training-side
    # and not part of the forward pass; not implemented as a Pallas kernel.
    print("KERNEL_OK")
</pallas_src>

<mosaic_0001>
module attributes {stable_mosaic.version = 11 : i64} {
  func.func @_fused_mlp_kernel(%arg0: i32, %arg1: memref<8x32xf32, #tpu.memory_space<vmem>>, %arg2: memref<32x128xbf16, #tpu.memory_space<vmem>>, %arg3: memref<1x128xf32, #tpu.memory_space<vmem>>, %arg4: memref<128x128xbf16, #tpu.memory_space<vmem>>, %arg5: memref<1x128xf32, #tpu.memory_space<vmem>>, %arg6: memref<128x128xbf16, #tpu.memory_space<vmem>>, %arg7: memref<1x128xf32, #tpu.memory_space<vmem>>, %arg8: memref<128x128xbf16, #tpu.memory_space<vmem>>, %arg9: memref<1x128xf32, #tpu.memory_space<vmem>>, %arg10: memref<8x4xf32, #tpu.memory_space<vmem>>) attributes {dimension_semantics = [#tpu.dimension_semantics<parallel>], iteration_bounds = array<i64: 1>, scalar_prefetch = 0 : i64, scratch_operands = 0 : i64, tpu.core_type = #tpu.core_type<tc>, window_params = [{transform_indices = @transform_0, window_bounds = array<i64: 8, 32>}, {pipeline_mode = #tpu.pipeline_mode<synchronous>, transform_indices = @transform_1, window_bounds = array<i64: 32, 128>}, {pipeline_mode = #tpu.pipeline_mode<synchronous>, transform_indices = @transform_2, window_bounds = array<i64: 1, 128>}, {pipeline_mode = #tpu.pipeline_mode<synchronous>, transform_indices = @transform_3, window_bounds = array<i64: 128, 128>}, {pipeline_mode = #tpu.pipeline_mode<synchronous>, transform_indices = @transform_4, window_bounds = array<i64: 1, 128>}, {pipeline_mode = #tpu.pipeline_mode<synchronous>, transform_indices = @transform_5, window_bounds = array<i64: 128, 128>}, {pipeline_mode = #tpu.pipeline_mode<synchronous>, transform_indices = @transform_6, window_bounds = array<i64: 1, 128>}, {pipeline_mode = #tpu.pipeline_mode<synchronous>, transform_indices = @transform_7, window_bounds = array<i64: 128, 128>}, {pipeline_mode = #tpu.pipeline_mode<synchronous>, transform_indices = @transform_8, window_bounds = array<i64: 1, 128>}, {transform_indices = @transform_9, window_bounds = array<i64: 8, 4>}]} {
    %c0 = arith.constant 0 : index
    %c0_0 = arith.constant 0 : index
    %0 = vector.load %arg1[%c0, %c0_0] : memref<8x32xf32, #tpu.memory_space<vmem>>, vector<8x32xf32>
    %c0_1 = arith.constant 0 : index
    %c0_2 = arith.constant 0 : index
    %1 = vector.load %arg2[%c0_1, %c0_2] : memref<32x128xbf16, #tpu.memory_space<vmem>>, vector<32x128xbf16>
    %c0_3 = arith.constant 0 : index
    %c0_4 = arith.constant 0 : index
    %2 = vector.load %arg3[%c0_3, %c0_4] : memref<1x128xf32, #tpu.memory_space<vmem>>, vector<1x128xf32>
    %3 = arith.truncf %0 : vector<8x32xf32> to vector<8x32xbf16>
    %cst = arith.constant dense<0.000000e+00> : vector<8x128xf32>
    %4 = tpu.matmul %3, %1, %cst {dimension_numbers = #tpu.dot_dimension_numbers<[1], [0], [0], [1], [0, 0, 1, 1], [], []>} : vector<8x32xbf16>, vector<32x128xbf16>, vector<8x128xf32> -> vector<8x128xf32>
    %5 = vector.broadcast %2 : vector<1x128xf32> to vector<8x128xf32>
    %6 = arith.addf %4, %5 : vector<8x128xf32>
    %cst_5 = arith.constant 0.000000e+00 : f32
    %7 = vector.broadcast %cst_5 : f32 to vector<8x128xf32>
    %8 = arith.maximumf %6, %7 : vector<8x128xf32>
    %c0_6 = arith.constant 0 : index
    %c0_7 = arith.constant 0 : index
    %9 = vector.load %arg4[%c0_6, %c0_7] : memref<128x128xbf16, #tpu.memory_space<vmem>>, vector<128x128xbf16>
    %c0_8 = arith.constant 0 : index
    %c0_9 = arith.constant 0 : index
    %10 = vector.load %arg5[%c0_8, %c0_9] : memref<1x128xf32, #tpu.memory_space<vmem>>, vector<1x128xf32>
    %11 = arith.truncf %8 : vector<8x128xf32> to vector<8x128xbf16>
    %cst_10 = arith.constant dense<0.000000e+00> : vector<8x128xf32>
    %12 = tpu.matmul %11, %9, %cst_10 {dimension_numbers = #tpu.dot_dimension_numbers<[1], [0], [0], [1], [0, 0, 1, 1], [], []>} : vector<8x128xbf16>, vector<128x128xbf16>, vector<8x128xf32> -> vector<8x128xf32>
    %13 = vector.broadcast %10 : vector<1x128xf32> to vector<8x128xf32>
    %14 = arith.addf %12, %13 : vector<8x128xf32>
    %cst_11 = arith.constant 0.00999999977 : f32
    %15 = vector.broadcast %cst_11 : f32 to vector<8x128xf32>
    %16 = arith.mulf %15, %14 : vector<8x128xf32>
    %17 = arith.maximumf %14, %16 : vector<8x128xf32>
    %c0_12 = arith.constant 0 : index
    %c0_13 = arith.constant 0 : index
    %18 = vector.load %arg6[%c0_12, %c0_13] : memref<128x128xbf16, #tpu.memory_space<vmem>>, vector<128x128xbf16>
    %c0_14 = arith.constant 0 : index
    %c0_15 = arith.constant 0 : index
    %19 = vector.load %arg7[%c0_14, %c0_15] : memref<1x128xf32, #tpu.memory_space<vmem>>, vector<1x128xf32>
    %20 = arith.truncf %17 : vector<8x128xf32> to vector<8x128xbf16>
    %cst_16 = arith.constant dense<0.000000e+00> : vector<8x128xf32>
    %21 = tpu.matmul %20, %18, %cst_16 {dimension_numbers = #tpu.dot_dimension_numbers<[1], [0], [0], [1], [0, 0, 1, 1], [], []>} : vector<8x128xbf16>, vector<128x128xbf16>, vector<8x128xf32> -> vector<8x128xf32>
    %22 = vector.broadcast %19 : vector<1x128xf32> to vector<8x128xf32>
    %23 = arith.addf %21, %22 : vector<8x128xf32>
    %cst_17 = arith.constant 0.00999999977 : f32
    %24 = vector.broadcast %cst_17 : f32 to vector<8x128xf32>
    %25 = arith.mulf %24, %23 : vector<8x128xf32>
    %26 = arith.maximumf %23, %25 : vector<8x128xf32>
    %c0_18 = arith.constant 0 : index
    %c0_19 = arith.constant 0 : index
    %27 = vector.load %arg8[%c0_18, %c0_19] : memref<128x128xbf16, #tpu.memory_space<vmem>>, vector<128x128xbf16>
    %c0_20 = arith.constant 0 : index
    %c0_21 = arith.constant 0 : index
    %28 = vector.load %arg9[%c0_20, %c0_21] : memref<1x128xf32, #tpu.memory_space<vmem>>, vector<1x128xf32>
    %29 = arith.truncf %26 : vector<8x128xf32> to vector<8x128xbf16>
    %cst_22 = arith.constant dense<0.000000e+00> : vector<8x128xf32>
    %30 = tpu.matmul %29, %27, %cst_22 {dimension_numbers = #tpu.dot_dimension_numbers<[1], [0], [0], [1], [0, 0, 1, 1], [], []>} : vector<8x128xbf16>, vector<128x128xbf16>, vector<8x128xf32> -> vector<8x128xf32>
    %31 = vector.broadcast %28 : vector<1x128xf32> to vector<8x128xf32>
    %32 = arith.addf %30, %31 : vector<8x128xf32>
    %33 = vector.extract_strided_slice %32 {offsets = [0, 0], sizes = [8, 4], strides = [1, 1]} : vector<8x128xf32> to vector<8x4xf32>
    %c0_23 = arith.constant 0 : index
    %c0_24 = arith.constant 0 : index
    %34 = vector.load %arg10[%c0_23, %c0_24] : memref<8x4xf32, #tpu.memory_space<vmem>>, vector<8x4xf32>
    tpu.vector_store %arg10[%c0_23, %c0_24], %33 {strides = array<i32>} : memref<8x4xf32, #tpu.memory_space<vmem>>, vector<8x4xf32>,
    return
  }
  func.func @transform_0(%arg0: i32) -> (i32, i32) {
    %c0_i32 = arith.constant 0 : i32
    %c0_i32_0 = arith.constant 0 : i32
    return %arg0, %c0_i32 : i32, i32
  }
  func.func @transform_1(%arg0: i32) -> (i32, i32) {
    %c0_i32 = arith.constant 0 : i32
    %c0_i32_0 = arith.constant 0 : i32
    %c0_i32_1 = arith.constant 0 : i32
    return %c0_i32, %c0_i32_0 : i32, i32
  }
  func.func @transform_2(%arg0: i32) -> (i32, i32) {
    %c0_i32 = arith.constant 0 : i32
    %c0_i32_0 = arith.constant 0 : i32
    %c0_i32_1 = arith.constant 0 : i32
    return %c0_i32, %c0_i32_0 : i32, i32
  }
  func.func @transform_3(%arg0: i32) -> (i32, i32) {
    %c0_i32 = arith.constant 0 : i32
    %c0_i32_0 = arith.constant 0 : i32
    %c0_i32_1 = arith.constant 0 : i32
    return %c0_i32, %c0_i32_0 : i32, i32
  }
  func.func @transform_4(%arg0: i32) -> (i32, i32) {
    %c0_i32 = arith.constant 0 : i32
    %c0_i32_0 = arith.constant 0 : i32
    %c0_i32_1 = arith.constant 0 : i32
    return %c0_i32, %c0_i32_0 : i32, i32
  }
  func.func @transform_5(%arg0: i32) -> (i32, i32) {
    %c0_i32 = arith.constant 0 : i32
    %c0_i32_0 = arith.constant 0 : i32
    %c0_i32_1 = arith.constant 0 : i32
    return %c0_i32, %c0_i32_0 : i32, i32
  }
  func.func @transform_6(%arg0: i32) -> (i32, i32) {
    %c0_i32 = arith.constant 0 : i32
    %c0_i32_0 = arith.constant 0 : i32
    %c0_i32_1 = arith.constant 0 : i32
    return %c0_i32, %c0_i32_0 : i32, i32
  }
  func.func @transform_7(%arg0: i32) -> (i32, i32) {
    %c0_i32 = arith.constant 0 : i32
    %c0_i32_0 = arith.constant 0 : i32
    %c0_i32_1 = arith.constant 0 : i32
    return %c0_i32, %c0_i32_0 : i32, i32
  }
  func.func @transform_8(%arg0: i32) -> (i32, i32) {
    %c0_i32 = arith.constant 0 : i32
    %c0_i32_0 = arith.constant 0 : i32
    %c0_i32_1 = arith.constant 0 : i32
    return %c0_i32, %c0_i32_0 : i32, i32
  }
  func.func @transform_9(%arg0: i32) -> (i32, i32) {
    %c0_i32 = arith.constant 0 : i32
    %c0_i32_0 = arith.constant 0 : i32
    return %arg0, %c0_i32 : i32, i32
  }
}

</mosaic_0001>

<llo_original>
// kernel: tpu_custom_call.1
$region0: #{tpu_custom_call.1}
  #allocation0 [shape = 'u32[]', space=smem, size = 0x4, offset = 0x4, fixed_abs, tag = 'smem constant byte address 0x4 - core index']
  #allocation1 [shape = 'u32[144,128]{1,0:T(1,128)}', space=vmem, size = 0x12000, scoped, tag = 'internal scratch']
  %s0 = inlined_call_operand.hbm [shape: f32[8,32], index: 0, kind: input, shape index: {}]
  %s1 = inlined_call_operand.hbm [shape: bf16[32,128], index: 1, kind: input, shape index: {}]
  %s2 = inlined_call_operand.vmem [shape: f32[1,128], index: 2, kind: input, shape index: {}]
  %s3 = inlined_call_operand.hbm [shape: bf16[128,128], index: 3, kind: input, shape index: {}]
  %s4 = inlined_call_operand.vmem [shape: f32[1,128], index: 4, kind: input, shape index: {}]
  %s5 = inlined_call_operand.hbm [shape: bf16[128,128], index: 5, kind: input, shape index: {}]
  %s6 = inlined_call_operand.vmem [shape: f32[1,128], index: 6, kind: input, shape index: {}]
  %s7 = inlined_call_operand.hbm [shape: bf16[128,128], index: 7, kind: input, shape index: {}]
  %s8 = inlined_call_operand.vmem [shape: f32[1,128], index: 8, kind: input, shape index: {}]
  %s9 = inlined_call_operand.vmem [shape: f32[8,4], index: 9, kind: output, shape index: {}]
  %s10 = sld [smem:[#allocation0]]
  $region66: #{tpu_custom_call.1} parent=0
    _
  %s12 = ssub.s32 1, %s10
  %s13 = scalar_select 0, %s12, %s10
  $region1: #{tpu_custom_call.1} parent=0
    #allocation2 [shape = 'u8[4096]{0}', space=vmem, size = 0x1000, scoped, tag = 'input window, operand 0, single buffered']
    #allocation3 [shape = 's32[1]{0}', space=sflag, size = 0x4, scoped, tag = 'scoped memory for tpu_custom_call.1']
    #allocation4 [shape = 'u8[8192]{0}', space=vmem, size = 0x2000, scoped, tag = 'input window, operand 1, single buffered']
    #allocation5 [shape = 's32[1]{0}', space=sflag, size = 0x4, scoped, tag = 'scoped memory for tpu_custom_call.1']
    #allocation6 [shape = 'u8[32768]{0}', space=vmem, size = 0x8000, scoped, tag = 'input window, operand 3, single buffered']
    #allocation7 [shape = 'u8[32768]{0}', space=vmem, size = 0x8000, scoped, tag = 'input window, operand 5, single buffered']
    #allocation8 [shape = 's32[1]{0}', space=sflag, size = 0x4, scoped, tag = 'scoped memory for tpu_custom_call.1']
    #allocation9 [shape = 'u8[32768]{0}', space=vmem, size = 0x8000, scoped, tag = 'input window, operand 7, single buffered']
    %14 = vsyncpa [#allocation3], 0
    %15 = vsyncpa [#allocation5], 0
    %16 = vsyncpa [#allocation8], 0
    // Predicated region
    $region2: #{tpu_custom_call.1} parent=1 // pred_check
      _
    $region3: #{tpu_custom_call.1} parent=1 // pred_check_branch
      %18 = sbr.rel (0) target = $region5
    $region4: #{tpu_custom_call.1} parent=1 // pred_region
      %s20 = ssub.s32 128, 128
      %21 = vsyncadd [#allocation3], %s20
      %s23 = sshll.u32 [#allocation2], 4
      %s24 = int_to_ptr.vmem [resolvable:$true] %s23
      %26 = dma.hbm_to_vmem [thread:$0]  %s0, 128, %s24, [#allocation3]
    $region5: #{tpu_custom_call.1} parent=1 // pred_fallthru
      _
    // Predicated region
    $region6: #{tpu_custom_call.1} parent=1 // pred_check
      _
    $region7: #{tpu_custom_call.1} parent=1 // pred_check_branch
      %28 = sbr.rel (0) target = $region9
    $region8: #{tpu_custom_call.1} parent=1 // pred_region
      %s30 = ssub.s32 256, 256
      %31 = vsyncadd [#allocation5], %s30
      %s32 = sshll.u32 [#allocation4], 4
      %s33 = int_to_ptr.vmem [resolvable:$true] %s32
      %38 = dma.hbm_to_vmem [thread:$0]  %s1, 256, %s33, [#allocation5], 64, 64, 4
    $region9: #{tpu_custom_call.1} parent=1 // pred_fallthru
      _
    // Predicated region
    $region10: #{tpu_custom_call.1} parent=1 // pred_check
      _
    $region11: #{tpu_custom_call.1} parent=1 // pred_check_branch
      %40 = sbr.rel (0) target = $region13
    $region12: #{tpu_custom_call.1} parent=1 // pred_region
      _
    $region13: #{tpu_custom_call.1} parent=1 // pred_fallthru
      _
    // Predicated region
    $region14: #{tpu_custom_call.1} parent=1 // pred_check
      _
    $region15: #{tpu_custom_call.1} parent=1 // pred_check_branch
      %42 = sbr.rel (0) target = $region17
    $region16: #{tpu_custom_call.1} parent=1 // pred_region
      %s44 = ssub.s32 1024, 1024
      %45 = vsyncadd [#allocation5], %s44
      %s46 = sshll.u32 [#allocation6], 4
      %s47 = int_to_ptr.vmem [resolvable:$true] %s46
      %52 = dma.hbm_to_vmem [thread:$0]  %s3, 1024, %s47, [#allocation5], 64, 64, 4
    $region17: #{tpu_custom_call.1} parent=1 // pred_fallthru
      _
    // Predicated region
    $region18: #{tpu_custom_call.1} parent=1 // pred_check
      _
    $region19: #{tpu_custom_call.1} parent=1 // pred_check_branch
      %54 = sbr.rel (0) target = $region21
    $region20: #{tpu_custom_call.1} parent=1 // pred_region
      _
    $region21: #{tpu_custom_call.1} parent=1 // pred_fallthru
      _
    // Predicated region
    $region22: #{tpu_custom_call.1} parent=1 // pred_check
      _
    $region23: #{tpu_custom_call.1} parent=1 // pred_check_branch
      %56 = sbr.rel (0) target = $region25
    $region24: #{tpu_custom_call.1} parent=1 // pred_region
      %s58 = ssub.s32 1024, 1024
      %59 = vsyncadd [#allocation8], %s58
      %s60 = sshll.u32 [#allocation7], 4
      %s61 = int_to_ptr.vmem [resolvable:$true] %s60
      %66 = dma.hbm_to_vmem [thread:$0]  %s5, 1024, %s61, [#allocation8], 64, 64, 4
    $region25: #{tpu_custom_call.1} parent=1 // pred_fallthru
      _
    // Predicated region
    $region26: #{tpu_custom_call.1} parent=1 // pred_check
      _
    $region27: #{tpu_custom_call.1} parent=1 // pred_check_branch
      %68 = sbr.rel (0) target = $region29
    $region28: #{tpu_custom_call.1} parent=1 // pred_region
      _
    $region29: #{tpu_custom_call.1} parent=1 // pred_fallthru
      _
    // Predicated region
    $region30: #{tpu_custom_call.1} parent=1 // pred_check
      _
    $region31: #{tpu_custom_call.1} parent=1 // pred_check_branch
      %70 = sbr.rel (0) target = $region33
    $region32: #{tpu_custom_call.1} parent=1 // pred_region
      %s72 = ssub.s32 1024, 1024
      %73 = vsyncadd [#allocation8], %s72
      %s74 = sshll.u32 [#allocation9], 4
      %s75 = int_to_ptr.vmem [resolvable:$true] %s74
      %80 = dma.hbm_to_vmem [thread:$0]  %s7, 1024, %s75, [#allocation8], 64, 64, 4
    $region33: #{tpu_custom_call.1} parent=1 // pred_fallthru
      _
    // Predicated region
    $region34: #{tpu_custom_call.1} parent=1 // pred_check
      _
    $region35: #{tpu_custom_call.1} parent=1 // pred_check_branch
      %82 = sbr.rel (0) target = $region37
    $region36: #{tpu_custom_call.1} parent=1 // pred_region
      _
    $region37: #{tpu_custom_call.1} parent=1 // pred_fallthru
      _
    // Predicated region
    $region38: #{tpu_custom_call.1} parent=1 // pred_check
      _
    $region39: #{tpu_custom_call.1} parent=1 // pred_check_branch
      %84 = sbr.rel (0) target = $region41
    $region40: #{tpu_custom_call.1} parent=1 // pred_region
      %85 = dma.done [#allocation3], 128
    $region41: #{tpu_custom_call.1} parent=1 // pred_fallthru
      _
    // Predicated region
    $region42: #{tpu_custom_call.1} parent=1 // pred_check
      _
    $region43: #{tpu_custom_call.1} parent=1 // pred_check_branch
      %87 = sbr.rel (0) target = $region45
    $region44: #{tpu_custom_call.1} parent=1 // pred_region
      %88 = dma.done [#allocation5], 256
    $region45: #{tpu_custom_call.1} parent=1 // pred_fallthru
      _
    // Predicated region
    $region46: #{tpu_custom_call.1} parent=1 // pred_check
      _
    $region47: #{tpu_custom_call.1} parent=1 // pred_check_branch
      %90 = sbr.rel (0) target = $region49
    $region48: #{tpu_custom_call.1} parent=1 // pred_region
      %91 = dma.done [#allocation5], 1024
    $region49: #{tpu_custom_call.1} parent=1 // pred_fallthru
      _
    // Predicated region
    $region50: #{tpu_custom_call.1} parent=1 // pred_check
      _
    $region51: #{tpu_custom_call.1} parent=1 // pred_check_branch
      %93 = sbr.rel (0) target = $region53
    $region52: #{tpu_custom_call.1} parent=1 // pred_region
      %94 = dma.done [#allocation8], 1024
    $region53: #{tpu_custom_call.1} parent=1 // pred_fallthru
      _
    // Predicated region
    $region54: #{tpu_custom_call.1} parent=1 // pred_check
      _
    $region55: #{tpu_custom_call.1} parent=1 // pred_check_branch
      %96 = sbr.rel (0) target = $region57
    $region56: #{tpu_custom_call.1} parent=1 // pred_region
      %97 = dma.done [#allocation8], 1024
    $region57: #{tpu_custom_call.1} parent=1 // pred_fallthru
      _
    %v99 = vld [vmem:[#allocation2] sm:$0xff]
    %v100 = vld [vmem:[#allocation4] sm:$0xf]
    %v101 = vld [vmem:[#allocation4 + $0x4] sm:$0xf]
    %v102 = vld [vmem:[#allocation4 + $0x8] sm:$0xf]
    %v103 = vld [vmem:[#allocation4 + $0xc] sm:$0xf]
    %v104 = vld [vmem:[%s2] sm:$0x1]
    %v105 = vpack.c.bf16 %v99, %v99
    %v107 = vlaneseq
    %v108 = vshrl.u32 %v107, 7
    %v109 = vsub.s32 0, %v108
    %v110 = vrot.slane %v104, %v109
    %v116 = vunpack.c.l.b16 %v100
    %v117 = vunpack.c.l.b16 %v101
    %v118 = vunpack.c.l.b16 %v102
    %v119 = vunpack.c.l.b16 %v103
    %v120 = vpack.c.b16 %v117, %v116
    %v121 = vpack.c.b16 %v119, %v118
    %vm124 = vcmask 261120
    %v126 = vsel %vm124, %v105, 0
    %128 = vmatprep.subr.bf16.mxu0 0
    %129 = vmatpush1.bf16.msra.mxu0 0
    %130 = vmatprep.subr.bf16.mxu0 0
    %131 = vmatpush1.bf16.msra.mxu0 0
    %132 = vmatprep.subr.bf16.mxu0 0
    %133 = vmatpush1.bf16.msra.mxu0 0
    %134 = vmatprep.subr.bf16.mxu0 0
    %135 = vmatpush1.bf16.msra.mxu0 0
    %136 = vmatprep.subr.bf16.mxu0 0
    %137 = vmatpush1.bf16.msra.mxu0 0
    %138 = vmatprep.subr.bf16.mxu0 0
    %139 = vmatpush1.bf16.msra.mxu0 0
    %140 = vmatprep.subr.bf16.mxu0 0
    %141 = vmatpush1.bf16.msra.mxu0 %v121
    %142 = vmatprep.subr.bf16.mxu0 0
    %143 = vmatpush1.bf16.msra.mxu0 %v120
    %144 = vmatprep.subr.bf16.mxu0 0
    %145 = vmatpush2.bf16.msra.mxu0 0
    %146 = vmatprep.subr.bf16.mxu0 0
    %147 = vmatpush2.bf16.msra.mxu0 0
    %148 = vmatprep.subr.bf16.mxu0 0
    %149 = vmatpush2.bf16.msra.mxu0 0
    %150 = vmatprep.subr.bf16.mxu0 0
    %151 = vmatpush2.bf16.msra.mxu0 0
    %152 = vmatprep.subr.bf16.mxu0 0
    %153 = vmatpush2.bf16.msra.mxu0 0
    %154 = vmatprep.subr.bf16.mxu0 0
    %155 = vmatpush2.bf16.msra.mxu0 0
    %156 = vmatprep.subr.bf16.mxu0 0
    %157 = vmatpush2.bf16.msra.mxu0 0
    %158 = vmatprep.subr.bf16.mxu0 0
    %159 = vmatpush2.bf16.msra.mxu0 0
    %160 = vmatprep.mubr.bf16.mxu0 0
    %161 = vmatmul.mubr.bf16.gmra.mxu0 %v126
    %v162 = vpop.f32.mrf.mxu0
    %v163 = vadd.f32 %v110, %v162
    %v164 = vpop.f32.mrf.mxu0
    %v165 = vpop.f32.mrf.mxu0
    %v166 = vpop.f32.mrf.mxu0
    %167 = vdwg.mxu0
    %v168 = vmax.f32 %v163, 0.0
    %v169 = vld [vmem:[#allocation6] sm:$0xf]
    %v170 = vld [vmem:[#allocation6 + $0x4] sm:$0xf]
    %v171 = vld [vmem:[#allocation6 + $0x8] sm:$0xf]
    %v172 = vld [vmem:[#allocation6 + $0xc] sm:$0xf]
    %v173 = vld [vmem:[#allocation6 + $0x10] sm:$0xf]
    %v174 = vld [vmem:[#allocation6 + $0x14] sm:$0xf]
    %v175 = vld [vmem:[#allocation6 + $0x18] sm:$0xf]
    %v176 = vld [vmem:[#allocation6 + $0x1c] sm:$0xf]
    %v177 = vld [vmem:[#allocation6 + $0x20] sm:$0xf]
    %v178 = vld [vmem:[#allocation6 + $0x24] sm:$0xf]
    %v179 = vld [vmem:[#allocation6 + $0x28] sm:$0xf]
    %v180 = vld [vmem:[#allocation6 + $0x2c] sm:$0xf]
    %v181 = vld [vmem:[#allocation6 + $0x30] sm:$0xf]
    %v182 = vld [vmem:[#allocation6 + $0x34] sm:$0xf]
    %v183 = vld [vmem:[#allocation6 + $0x38] sm:$0xf]
    %v184 = vld [vmem:[#allocation6 + $0x3c] sm:$0xf]
    %v185 = vld [vmem:[%s4] sm:$0x1]
    %v186 = vpack.c.bf16 %v168, %v168
    %v188 = vlaneseq
    %v189 = vshrl.u32 %v188, 7
    %v190 = vsub.s32 0, %v189
    %v191 = vrot.slane %v185, %v190
    %v209 = vunpack.c.l.b16 %v169
    %v210 = vunpack.c.l.b16 %v170
    %v211 = vunpack.c.l.b16 %v171
    %v212 = vunpack.c.l.b16 %v172
    %v213 = vunpack.c.l.b16 %v173
    %v214 = vunpack.c.l.b16 %v174
    %v215 = vunpack.c.l.b16 %v175
    %v216 = vunpack.c.l.b16 %v176
    %v217 = vunpack.c.l.b16 %v177
    %v218 = vunpack.c.l.b16 %v178
    %v219 = vunpack.c.l.b16 %v179
    %v220 = vunpack.c.l.b16 %v180
    %v221 = vunpack.c.l.b16 %v181
    %v222 = vunpack.c.l.b16 %v182
    %v223 = vunpack.c.l.b16 %v183
    %v224 = vunpack.c.l.b16 %v184
    %v225 = vpack.c.b16 %v210, %v209
    %v226 = vpack.c.b16 %v212, %v211
    %v227 = vpack.c.b16 %v214, %v213
    %v228 = vpack.c.b16 %v216, %v215
    %v229 = vpack.c.b16 %v218, %v217
    %v230 = vpack.c.b16 %v220, %v219
    %v231 = vpack.c.b16 %v222, %v221
    %v232 = vpack.c.b16 %v224, %v223
    %241 = vmatprep.subr.bf16.mxu0 0
    %242 = vmatpush1.bf16.msra.mxu0 %v232
    %243 = vmatprep.subr.bf16.mxu0 0
    %244 = vmatpush1.bf16.msra.mxu0 %v231
    %245 = vmatprep.subr.bf16.mxu0 0
    %246 = vmatpush1.bf16.msra.mxu0 %v230
    %247 = vmatprep.subr.bf16.mxu0 0
    %248 = vmatpush1.bf16.msra.mxu0 %v229
    %249 = vmatprep.subr.bf16.mxu0 0
    %250 = vmatpush1.bf16.msra.mxu0 %v228
    %251 = vmatprep.subr.bf16.mxu0 0
    %252 = vmatpush1.bf16.msra.mxu0 %v227
    %253 = vmatprep.subr.bf16.mxu0 0
    %254 = vmatpush1.bf16.msra.mxu0 %v226
    %255 = vmatprep.subr.bf16.mxu0 0
    %256 = vmatpush1.bf16.msra.mxu0 %v225
    %257 = vmatprep.subr.bf16.mxu0 0
    %258 = vmatpush2.bf16.msra.mxu0 0
    %259 = vmatprep.subr.bf16.mxu0 0
    %260 = vmatpush2.bf16.msra.mxu0 0
    %261 = vmatprep.subr.bf16.mxu0 0
    %262 = vmatpush2.bf16.msra.mxu0 0
    %263 = vmatprep.subr.bf16.mxu0 0
    %264 = vmatpush2.bf16.msra.mxu0 0
    %265 = vmatprep.subr.bf16.mxu0 0
    %266 = vmatpush2.bf16.msra.mxu0 0
    %267 = vmatprep.subr.bf16.mxu0 0
    %268 = vmatpush2.bf16.msra.mxu0 0
    %269 = vmatprep.subr.bf16.mxu0 0
    %270 = vmatpush2.bf16.msra.mxu0 0
    %271 = vmatprep.subr.bf16.mxu0 0
    %272 = vmatpush2.bf16.msra.mxu0 0
    %273 = vmatprep.mubr.bf16.mxu0 0
    %274 = vmatmul.mubr.bf16.gmra.mxu0 %v186
    %v275 = vpop.f32.mrf.mxu0
    %v276 = vadd.f32 %v191, %v275
    %v277 = vpop.f32.mrf.mxu0
    %v278 = vpop.f32.mrf.mxu0
    %v279 = vpop.f32.mrf.mxu0
    %280 = vdwg.mxu0
    %v281 = vmul.f32 %v276, 0.01
    %v282 = vmax.f32 %v276, %v281
    %v283 = vld [vmem:[#allocation7] sm:$0xf]
    %v284 = vld [vmem:[#allocation7 + $0x4] sm:$0xf]
    %v285 = vld [vmem:[#allocation7 + $0x8] sm:$0xf]
    %v286 = vld [vmem:[#allocation7 + $0xc] sm:$0xf]
    %v287 = vld [vmem:[#allocation7 + $0x10] sm:$0xf]
    %v288 = vld [vmem:[#allocation7 + $0x14] sm:$0xf]
    %v289 = vld [vmem:[#allocation7 + $0x18] sm:$0xf]
    %v290 = vld [vmem:[#allocation7 + $0x1c] sm:$0xf]
    %v291 = vld [vmem:[#allocation7 + $0x20] sm:$0xf]
    %v292 = vld [vmem:[#allocation7 + $0x24] sm:$0xf]
    %v293 = vld [vmem:[#allocation7 + $0x28] sm:$0xf]
    %v294 = vld [vmem:[#allocation7 + $0x2c] sm:$0xf]
    %v295 = vld [vmem:[#allocation7 + $0x30] sm:$0xf]
    %v296 = vld [vmem:[#allocation7 + $0x34] sm:$0xf]
    %v297 = vld [vmem:[#allocation7 + $0x38] sm:$0xf]
    %v298 = vld [vmem:[#allocation7 + $0x3c] sm:$0xf]
    %v299 = vld [vmem:[%s6] sm:$0x1]
    %v300 = vpack.c.bf16 %v282, %v282
    %v302 = vlaneseq
    %v303 = vshrl.u32 %v302, 7
    %v304 = vsub.s32 0, %v303
    %v305 = vrot.slane %v299, %v304
    %v323 = vunpack.c.l.b16 %v283
    %v324 = vunpack.c.l.b16 %v284
    %v325 = vunpack.c.l.b16 %v285
    %v326 = vunpack.c.l.b16 %v286
    %v327 = vunpack.c.l.b16 %v287
    %v328 = vunpack.c.l.b16 %v288
    %v329 = vunpack.c.l.b16 %v289
    %v330 = vunpack.c.l.b16 %v290
    %v331 = vunpack.c.l.b16 %v291
    %v332 = vunpack.c.l.b16 %v292
    %v333 = vunpack.c.l.b16 %v293
    %v334 = vunpack.c.l.b16 %v294
    %v335 = vunpack.c.l.b16 %v295
    %v336 = vunpack.c.l.b16 %v296
    %v337 = vunpack.c.l.b16 %v297
    %v338 = vunpack.c.l.b16 %v298
    %v339 = vpack.c.b16 %v324, %v323
    %v340 = vpack.c.b16 %v326, %v325
    %v341 = vpack.c.b16 %v328, %v327
    %v342 = vpack.c.b16 %v330, %v329
    %v343 = vpack.c.b16 %v332, %v331
    %v344 = vpack.c.b16 %v334, %v333
    %v345 = vpack.c.b16 %v336, %v335
    %v346 = vpack.c.b16 %v338, %v337
    %355 = vmatprep.subr.bf16.mxu0 0
    %356 = vmatpush1.bf16.msra.mxu0 %v346
    %357 = vmatprep.subr.bf16.mxu0 0
    %358 = vmatpush1.bf16.msra.mxu0 %v345
    %359 = vmatprep.subr.bf16.mxu0 0
    %360 = vmatpush1.bf16.msra.mxu0 %v344
    %361 = vmatprep.subr.bf16.mxu0 0
    %362 = vmatpush1.bf16.msra.mxu0 %v343
    %363 = vmatprep.subr.bf16.mxu0 0
    %364 = vmatpush1.bf16.msra.mxu0 %v342
    %365 = vmatprep.subr.bf16.mxu0 0
    %366 = vmatpush1.bf16.msra.mxu0 %v341
    %367 = vmatprep.subr.bf16.mxu0 0
    %368 = vmatpush1.bf16.msra.mxu0 %v340
    %369 = vmatprep.subr.bf16.mxu0 0
    %370 = vmatpush1.bf16.msra.mxu0 %v339
    %371 = vmatprep.subr.bf16.mxu0 0
    %372 = vmatpush2.bf16.msra.mxu0 0
    %373 = vmatprep.subr.bf16.mxu0 0
    %374 = vmatpush2.bf16.msra.mxu0 0
    %375 = vmatprep.subr.bf16.mxu0 0
    %376 = vmatpush2.bf16.msra.mxu0 0
    %377 = vmatprep.subr.bf16.mxu0 0
    %378 = vmatpush2.bf16.msra.mxu0 0
    %379 = vmatprep.subr.bf16.mxu0 0
    %380 = vmatpush2.bf16.msra.mxu0 0
    %381 = vmatprep.subr.bf16.mxu0 0
    %382 = vmatpush2.bf16.msra.mxu0 0
    %383 = vmatprep.subr.bf16.mxu0 0
    %384 = vmatpush2.bf16.msra.mxu0 0
    %385 = vmatprep.subr.bf16.mxu0 0
    %386 = vmatpush2.bf16.msra.mxu0 0
    %387 = vmatprep.mubr.bf16.mxu0 0
    %388 = vmatmul.mubr.bf16.gmra.mxu0 %v300
    %v389 = vpop.f32.mrf.mxu0
    %v390 = vadd.f32 %v305, %v389
    %v391 = vpop.f32.mrf.mxu0
    %v392 = vpop.f32.mrf.mxu0
    %v393 = vpop.f32.mrf.mxu0
    %394 = vdwg.mxu0
    %v395 = vmul.f32 %v390, 0.01
    %v396 = vmax.f32 %v390, %v395
    %v397 = vld [vmem:[#allocation9] sm:$0xf]
    %v398 = vld [vmem:[#allocation9 + $0x4] sm:$0xf]
    %v399 = vld [vmem:[#allocation9 + $0x8] sm:$0xf]
    %v400 = vld [vmem:[#allocation9 + $0xc] sm:$0xf]
    %v401 = vld [vmem:[#allocation9 + $0x10] sm:$0xf]
    %v402 = vld [vmem:[#allocation9 + $0x14] sm:$0xf]
    %v403 = vld [vmem:[#allocation9 + $0x18] sm:$0xf]
    %v404 = vld [vmem:[#allocation9 + $0x1c] sm:$0xf]
    %v405 = vld [vmem:[#allocation9 + $0x20] sm:$0xf]
    %v406 = vld [vmem:[#allocation9 + $0x24] sm:$0xf]
    %v407 = vld [vmem:[#allocation9 + $0x28] sm:$0xf]
    %v408 = vld [vmem:[#allocation9 + $0x2c] sm:$0xf]
    %v409 = vld [vmem:[#allocation9 + $0x30] sm:$0xf]
    %v410 = vld [vmem:[#allocation9 + $0x34] sm:$0xf]
    %v411 = vld [vmem:[#allocation9 + $0x38] sm:$0xf]
    %v412 = vld [vmem:[#allocation9 + $0x3c] sm:$0xf]
    %v413 = vld [vmem:[%s8] sm:$0x1]
    %v414 = vpack.c.bf16 %v396, %v396
    %v416 = vlaneseq
    %v417 = vshrl.u32 %v416, 7
    %v418 = vsub.s32 0, %v417
    %v419 = vrot.slane %v413, %v418
    %v437 = vunpack.c.l.b16 %v397
    %v438 = vunpack.c.l.b16 %v398
    %v439 = vunpack.c.l.b16 %v399
    %v440 = vunpack.c.l.b16 %v400
    %v441 = vunpack.c.l.b16 %v401
    %v442 = vunpack.c.l.b16 %v402
    %v443 = vunpack.c.l.b16 %v403
    %v444 = vunpack.c.l.b16 %v404
    %v445 = vunpack.c.l.b16 %v405
    %v446 = vunpack.c.l.b16 %v406
    %v447 = vunpack.c.l.b16 %v407
    %v448 = vunpack.c.l.b16 %v408
    %v449 = vunpack.c.l.b16 %v409
    %v450 = vunpack.c.l.b16 %v410
    %v451 = vunpack.c.l.b16 %v411
    %v452 = vunpack.c.l.b16 %v412
    %v453 = vpack.c.b16 %v438, %v437
    %v454 = vpack.c.b16 %v440, %v439
    %v455 = vpack.c.b16 %v442, %v441
    %v456 = vpack.c.b16 %v444, %v443
    %v457 = vpack.c.b16 %v446, %v445
    %v458 = vpack.c.b16 %v448, %v447
    %v459 = vpack.c.b16 %v450, %v449
    %v460 = vpack.c.b16 %v452, %v451
    %469 = vmatprep.subr.bf16.mxu0 0
    %470 = vmatpush1.bf16.msra.mxu0 %v460
    %471 = vmatprep.subr.bf16.mxu0 0
    %472 = vmatpush1.bf16.msra.mxu0 %v459
    %473 = vmatprep.subr.bf16.mxu0 0
    %474 = vmatpush1.bf16.msra.mxu0 %v458
    %475 = vmatprep.subr.bf16.mxu0 0
    %476 = vmatpush1.bf16.msra.mxu0 %v457
    %477 = vmatprep.subr.bf16.mxu0 0
    %478 = vmatpush1.bf16.msra.mxu0 %v456
    %479 = vmatprep.subr.bf16.mxu0 0
    %480 = vmatpush1.bf16.msra.mxu0 %v455
    %481 = vmatprep.subr.bf16.mxu0 0
    %482 = vmatpush1.bf16.msra.mxu0 %v454
    %483 = vmatprep.subr.bf16.mxu0 0
    %484 = vmatpush1.bf16.msra.mxu0 %v453
    %485 = vmatprep.subr.bf16.mxu0 0
    %486 = vmatpush2.bf16.msra.mxu0 0
    %487 = vmatprep.subr.bf16.mxu0 0
    %488 = vmatpush2.bf16.msra.mxu0 0
    %489 = vmatprep.subr.bf16.mxu0 0
    %490 = vmatpush2.bf16.msra.mxu0 0
    %491 = vmatprep.subr.bf16.mxu0 0
    %492 = vmatpush2.bf16.msra.mxu0 0
    %493 = vmatprep.subr.bf16.mxu0 0
    %494 = vmatpush2.bf16.msra.mxu0 0
    %495 = vmatprep.subr.bf16.mxu0 0
    %496 = vmatpush2.bf16.msra.mxu0 0
    %497 = vmatprep.subr.bf16.mxu0 0
    %498 = vmatpush2.bf16.msra.mxu0 0
    %499 = vmatprep.subr.bf16.mxu0 0
    %500 = vmatpush2.bf16.msra.mxu0 0
    %501 = vmatprep.mubr.bf16.mxu0 0
    %502 = vmatmul.mubr.bf16.gmra.mxu0 %v414
    %v503 = vpop.f32.mrf.mxu0
    %v504 = vadd.f32 %v419, %v503
    %v505 = vpop.f32.mrf.mxu0
    %v506 = vpop.f32.mrf.mxu0
    %v507 = vpop.f32.mrf.mxu0
    %508 = vdwg.mxu0
    %vm509 = vcmask 31744
    %510 = vst.msk [vmem:[%s9] sm:$0xff] %vm509, %v504
    // Predicated region
    $region58: #{tpu_custom_call.1} parent=1 // pred_check
      _
    $region59: #{tpu_custom_call.1} parent=1 // pred_check_branch
      %512 = sbr.rel (0) target = $region61
    $region60: #{tpu_custom_call.1} parent=1 // pred_region
      _
    $region61: #{tpu_custom_call.1} parent=1 // pred_fallthru
      _
    // Predicated region
    $region62: #{tpu_custom_call.1} parent=1 // pred_check
      _
    $region63: #{tpu_custom_call.1} parent=1 // pred_check_branch
      %514 = sbr.rel (0) target = $region65
    $region64: #{tpu_custom_call.1} parent=1 // pred_region
      _
    $region65: #{tpu_custom_call.1} parent=1 // pred_fallthru
      _
    %515 = vsyncpa [#allocation3], 1
    %516 = vsyncpa [#allocation5], 1
    %517 = vsyncpa [#allocation8], 1

</llo_original>
